<compile_context>
chip_gen: v5e
topology: v5e:2x2
jax: 0.10.0
libtpu: 0.0.40
codegen_flags: <defaults>
</compile_context>

<pallas_src>
import jax
import jax.numpy as jnp
from jax.experimental import pallas as pl
from jax.experimental.pallas import tpu as pltpu


def _round_up(x, m):
    return (x + m - 1) // m * m


# ---------------------------------------------------------------------------
# Pallas kernel: fused (slice+concat) + 3-layer MLP
#   q = sum(relu(relu(state @ W1s + action @ W1a + b1) @ W2 + b2) * w3_row) + b3
# ---------------------------------------------------------------------------
def _make_critic_kernel(compute_dtype):
    def kernel(state_ref, action_ref,
               w1s_ref, w1a_ref, b1_ref,
               w2_ref, b2_ref, w3_ref, b3_ref, q_ref):
        st = state_ref[...]            # [TB, S] f32
        act = action_ref[...]          # [TB, A] f32

        # Layer 1: two matmuls replace concat([cur_obs, goal, act]) @ W1.
        # W1_state already has zero rows for the obs columns the spec drops,
        # so no lane slicing happens in the hot body. bf16 MXU, f32 accumulate.
        h1 = (jnp.dot(st.astype(compute_dtype), w1s_ref[...],
                      preferred_element_type=jnp.float32)
              + jnp.dot(act.astype(compute_dtype), w1a_ref[...],
                        preferred_element_type=jnp.float32))      # [TB, Hp] f32
        h1 = jnp.maximum(h1 + b1_ref[...], 0.0)                   # bias + ReLU in f32 (VPU)

        # Layer 2
        h2 = jnp.dot(h1.astype(compute_dtype), w2_ref[...],
                     preferred_element_type=jnp.float32)          # [TB, Hp] f32
        h2 = jnp.maximum(h2 + b2_ref[...], 0.0)

        # Layer 3 (N=1): VPU multiply + XLU lane reduction -> [TB, 1] column,
        # then a cheap XLU transpose to a lane-dense [1, TB] row for the store.
        q_col = jnp.sum(h2 * w3_ref[...], axis=-1, keepdims=True) + b3_ref[...]  # [TB, 1]
        q_ref[...] = q_col.T[None].astype(q_ref.dtype)            # [1, 1, TB]

    return kernel


def _critic_q(state, action, w1s, w1a, b1, w2, b2, w3_row, b3,
              *, max_batch_tile=2048, num_cores=1):
    B, S = state.shape
    A = action.shape[1]
    Hp = w2.shape[0]

    # Batch tile: as large as possible (this kernel is per-grid-step-overhead
    # bound), but split into >= num_cores tiles so multi-TC chips (v7x) can
    # shard the "parallel" batch axis. Weights stay VMEM-resident across steps.
    if num_cores > 1 and B > 8:
        TB = _round_up(pl.cdiv(B, num_cores), 8)
    else:
        TB = B
    TB = min(TB, max_batch_tile)
    num_tiles = pl.cdiv(B, TB)
    grid = (num_tiles,)

    flops = 2 * B * (S * Hp + A * Hp + Hp * Hp + Hp)
    bytes_accessed = (
        state.size * state.dtype.itemsize
        + action.size * action.dtype.itemsize
        + sum(a.size * a.dtype.itemsize
              for a in (w1s, w1a, b1, w2, b2, w3_row, b3))
        + num_tiles * TB * 4)  # q output

    kernel = _make_critic_kernel(w2.dtype)

    def pinned(shape):
        # Whole-array block, same block index every grid step -> DMA'd once,
        # stays resident in VMEM across the batch grid.
        return pl.BlockSpec(shape, lambda i: (0, 0))

    out = pl.pallas_call(
        kernel,
        out_shape=jax.ShapeDtypeStruct((num_tiles, 1, TB), jnp.float32),
        grid=grid,
        in_specs=[
            pl.BlockSpec((TB, S), lambda i: (i, 0)),   # state  (batch-tiled)
            pl.BlockSpec((TB, A), lambda i: (i, 0)),   # action (batch-tiled)
            pinned(w1s.shape), pinned(w1a.shape), pinned(b1.shape),
            pinned(w2.shape), pinned(b2.shape), pinned(w3_row.shape), pinned(b3.shape),
        ],
        # Lane-dense output: each grid step writes one [1, TB] row (no masked
        # single-lane stores); the wrapper reshapes back to [B, 1] below.
        out_specs=pl.BlockSpec((1, 1, TB), lambda i: (i, 0, 0)),
        compiler_params=pltpu.CompilerParams(dimension_semantics=("parallel",)),
        cost_estimate=pl.CostEstimate(flops=flops, transcendentals=0,
                                      bytes_accessed=bytes_accessed),
    )(state, action, w1s, w1a, b1, w2, b2, w3_row, b3)

    # [num_tiles, 1, TB] -> [B, 1]; rows in a trailing partial tile are dropped.
    return out.reshape(num_tiles * TB, 1)[:B]


# ---------------------------------------------------------------------------
# CriticLastFrame module (JAX wrapper)
# ---------------------------------------------------------------------------
class CriticLastFrame:
    def __init__(self, obs_dim, goal_dim, action_dim, hidden_dim=256, time_frame=5,
                 param_dtype=jnp.bfloat16, key=jax.random.PRNGKey(0),
                 max_batch_tile=2048, num_cores=1):
        self.obs_dim = obs_dim
        self.goal_dim = goal_dim
        self.action_dim = action_dim
        self.hidden_dim = hidden_dim
        self.time_frame = time_frame
        self.obs_per_frame = obs_dim // time_frame
        self.max_batch_tile = max_batch_tile
        # TODO(synk): set num_cores=2 on v7x (2 TensorCores/chip) so mid-size
        # batches split across both cores; 1 is correct for v5e/v6e (single TC).
        self.num_cores = num_cores
        in_dim = self.obs_per_frame + goal_dim + action_dim

        # Lane-dense hidden width (zero-padded; padded lanes provably stay 0).
        hp = _round_up(hidden_dim, 128)
        self.hidden_pad = hp
        pad_h = hp - hidden_dim

        # Deterministic init matching torch.nn.Linear default: U(+-1/sqrt(fan_in)).
        def linear_init(k, fan_in, fan_out):
            k_w, k_b = jax.random.split(k)
            bound = 1.0 / jnp.sqrt(fan_in)
            w = jax.random.uniform(k_w, (fan_in, fan_out), jnp.float32, -bound, bound)
            b = jax.random.uniform(k_b, (1, fan_out), jnp.float32, -bound, bound)
            return w, b

        k1, k2, k3 = jax.random.split(key, 3)
        w1, b1 = linear_init(k1, in_dim, hidden_dim)
        w2, b2 = linear_init(k2, hidden_dim, hidden_dim)
        w3, b3 = linear_init(k3, hidden_dim, 1)

        def pad_cols(x):
            return jnp.pad(x, ((0, 0), (0, pad_h)))

        opf = self.obs_per_frame
        # Fold the forward's slice+concat into the weights so the kernel computes
        #   h1 = state @ W1_state + action @ W1_act + b1
        #   W1_state rows [0:opf]                <- w1 rows for current_obs
        #   W1_state rows [opf:obs_dim]          <- 0  (obs columns the forward drops)
        #   W1_state rows [obs_dim:obs_dim+goal] <- w1 rows for goal
        # NOTE: the PyTorch forward takes current_obs = obs[:, :obs_per_frame]
        # (the FIRST obs_per_frame columns); that is exactly what is encoded here.
        w1p = pad_cols(w1)                                                    # [in_dim, Hp]
        w1_state = jnp.zeros((obs_dim + goal_dim, hp), jnp.float32)
        w1_state = w1_state.at[:opf].set(w1p[:opf])
        w1_state = w1_state.at[obs_dim:obs_dim + goal_dim].set(w1p[opf:opf + goal_dim])
        self.w1s = w1_state.astype(param_dtype)                               # [S, Hp] bf16
        self.w1a = w1p[opf + goal_dim:].astype(param_dtype)                   # [A, Hp] bf16
        self.b1 = pad_cols(b1)                                                # [1, Hp] f32
        self.w2 = jnp.pad(w2, ((0, pad_h), (0, pad_h))).astype(param_dtype)   # [Hp, Hp] bf16
        self.b2 = pad_cols(b2)                                                # [1, Hp] f32
        self.w3_row = pad_cols(w3.T)                                          # [1, Hp] f32 (VPU/XLU path)
        self.b3 = b3                                                          # [1, 1]  f32

    def __call__(self, state, action):
        # state: [B, obs_dim + goal_dim]   action: [B, action_dim]   ->   q: [B, 1]
        return _critic_q(state, action,
                         self.w1s, self.w1a, self.b1,
                         self.w2, self.b2, self.w3_row, self.b3,
                         max_batch_tile=self.max_batch_tile,
                         num_cores=self.num_cores)


# ---------------------------------------------------------------------------
# References
# ---------------------------------------------------------------------------
def _reference(critic, state, action):
    """Pure-JAX reference mirroring the kernel numerics (bf16 matmuls, f32 accum)."""
    cd = critic.w2.dtype
    h1 = (jnp.dot(state.astype(cd), critic.w1s, preferred_element_type=jnp.float32)
          + jnp.dot(action.astype(cd), critic.w1a, preferred_element_type=jnp.float32))
    h1 = jnp.maximum(h1 + critic.b1, 0.0)
    h2 = jnp.dot(h1.astype(cd), critic.w2, preferred_element_type=jnp.float32)
    h2 = jnp.maximum(h2 + critic.b2, 0.0)
    return jnp.sum(h2 * critic.w3_row, axis=-1, keepdims=True) + critic.b3


def _spec_reference(critic, state, action):
    """Slice + concat formulation matching the PyTorch forward (same bf16 weights)."""
    obs = state[:, :critic.obs_dim]
    goal = state[:, critic.obs_dim:critic.obs_dim + critic.goal_dim]
    cur = obs[:, :critic.obs_per_frame]
    sa = jnp.concatenate([cur, goal, action], axis=-1)
    w1 = jnp.concatenate([critic.w1s[:critic.obs_per_frame],
                          critic.w1s[critic.obs_dim:critic.obs_dim + critic.goal_dim],
                          critic.w1a], axis=0)
    cd = critic.w2.dtype
    h1 = jnp.maximum(jnp.dot(sa.astype(cd), w1,
                             preferred_element_type=jnp.float32) + critic.b1, 0.0)
    h2 = jnp.maximum(jnp.dot(h1.astype(cd), critic.w2,
                             preferred_element_type=jnp.float32) + critic.b2, 0.0)
    return jnp.sum(h2 * critic.w3_row, axis=-1, keepdims=True) + critic.b3


if __name__ == "__main__":
    # Small shapes consistent with the module:
    #   time_frame=5, obs_dim=20 (-> obs_per_frame=4), goal_dim=3, action_dim=5, hidden=32
    B = 8
    obs_dim, goal_dim, action_dim, hidden_dim, time_frame = 20, 3, 5, 32, 5

    key = jax.random.PRNGKey(0)
    k_state, k_action, k_params = jax.random.split(key, 3)
    state = jax.random.normal(k_state, (B, obs_dim + goal_dim), jnp.float32)
    action = jax.random.normal(k_action, (B, action_dim), jnp.float32)

    critic = CriticLastFrame(obs_dim, goal_dim, action_dim,
                             hidden_dim=hidden_dim, time_frame=time_frame,
                             key=k_params)

    q = critic(state, action)
    jax.block_until_ready(q)

    assert q.shape == (B, 1), q.shape
    q_ref = _reference(critic, state, action)
    assert jnp.allclose(q, q_ref, atol=1e-3, rtol=1e-3), "mismatch vs kernel-mirror reference"
    q_spec = _spec_reference(critic, state, action)
    assert jnp.allclose(q, q_spec, atol=1e-3, rtol=1e-3), "mismatch vs slice+concat reference"

    print("KERNEL_OK")
</pallas_src>

<mosaic_0001>
module attributes {stable_mosaic.version = 11 : i64} {
  func.func @kernel(%arg0: i32, %arg1: memref<8x23xf32, #tpu.memory_space<vmem>>, %arg2: memref<8x5xf32, #tpu.memory_space<vmem>>, %arg3: memref<23x128xbf16, #tpu.memory_space<vmem>>, %arg4: memref<5x128xbf16, #tpu.memory_space<vmem>>, %arg5: memref<1x128xf32, #tpu.memory_space<vmem>>, %arg6: memref<128x128xbf16, #tpu.memory_space<vmem>>, %arg7: memref<1x128xf32, #tpu.memory_space<vmem>>, %arg8: memref<1x128xf32, #tpu.memory_space<vmem>>, %arg9: memref<1x1xf32, #tpu.memory_space<vmem>>, %arg10: memref<1x1x8xf32, #tpu.memory_space<vmem>>) attributes {dimension_semantics = [#tpu.dimension_semantics<parallel>], iteration_bounds = array<i64: 1>, scalar_prefetch = 0 : i64, scratch_operands = 0 : i64, tpu.core_type = #tpu.core_type<tc>, window_params = [{transform_indices = @transform_0, window_bounds = array<i64: 8, 23>}, {transform_indices = @transform_1, window_bounds = array<i64: 8, 5>}, {pipeline_mode = #tpu.pipeline_mode<synchronous>, transform_indices = @transform_2, window_bounds = array<i64: 23, 128>}, {pipeline_mode = #tpu.pipeline_mode<synchronous>, transform_indices = @transform_3, window_bounds = array<i64: 5, 128>}, {pipeline_mode = #tpu.pipeline_mode<synchronous>, transform_indices = @transform_4, window_bounds = array<i64: 1, 128>}, {pipeline_mode = #tpu.pipeline_mode<synchronous>, transform_indices = @transform_5, window_bounds = array<i64: 128, 128>}, {pipeline_mode = #tpu.pipeline_mode<synchronous>, transform_indices = @transform_6, window_bounds = array<i64: 1, 128>}, {pipeline_mode = #tpu.pipeline_mode<synchronous>, transform_indices = @transform_7, window_bounds = array<i64: 1, 128>}, {pipeline_mode = #tpu.pipeline_mode<synchronous>, transform_indices = @transform_8, window_bounds = array<i64: 1, 1>}, {transform_indices = @transform_9, window_bounds = array<i64: 1, 1, 8>}]} {
    %c0 = arith.constant 0 : index
    %c0_0 = arith.constant 0 : index
    %0 = vector.load %arg1[%c0, %c0_0] : memref<8x23xf32, #tpu.memory_space<vmem>>, vector<8x23xf32>
    %c0_1 = arith.constant 0 : index
    %c0_2 = arith.constant 0 : index
    %1 = vector.load %arg2[%c0_1, %c0_2] : memref<8x5xf32, #tpu.memory_space<vmem>>, vector<8x5xf32>
    %2 = arith.truncf %0 : vector<8x23xf32> to vector<8x23xbf16>
    %c0_3 = arith.constant 0 : index
    %c0_4 = arith.constant 0 : index
    %3 = vector.load %arg3[%c0_3, %c0_4] : memref<23x128xbf16, #tpu.memory_space<vmem>>, vector<23x128xbf16>
    %cst = arith.constant dense<0.000000e+00> : vector<8x128xf32>
    %4 = tpu.matmul %2, %3, %cst {dimension_numbers = #tpu.dot_dimension_numbers<[1], [0], [0], [1], [0, 0, 1, 1], [], []>} : vector<8x23xbf16>, vector<23x128xbf16>, vector<8x128xf32> -> vector<8x128xf32>
    %5 = arith.truncf %1 : vector<8x5xf32> to vector<8x5xbf16>
    %c0_5 = arith.constant 0 : index
    %c0_6 = arith.constant 0 : index
    %6 = vector.load %arg4[%c0_5, %c0_6] : memref<5x128xbf16, #tpu.memory_space<vmem>>, vector<5x128xbf16>
    %cst_7 = arith.constant dense<0.000000e+00> : vector<8x128xf32>
    %7 = tpu.matmul %5, %6, %cst_7 {dimension_numbers = #tpu.dot_dimension_numbers<[1], [0], [0], [1], [0, 0, 1, 1], [], []>} : vector<8x5xbf16>, vector<5x128xbf16>, vector<8x128xf32> -> vector<8x128xf32>
    %8 = arith.addf %4, %7 : vector<8x128xf32>
    %c0_8 = arith.constant 0 : index
    %c0_9 = arith.constant 0 : index
    %9 = vector.load %arg5[%c0_8, %c0_9] : memref<1x128xf32, #tpu.memory_space<vmem>>, vector<1x128xf32>
    %10 = vector.broadcast %9 : vector<1x128xf32> to vector<8x128xf32>
    %11 = arith.addf %8, %10 : vector<8x128xf32>
    %cst_10 = arith.constant 0.000000e+00 : f32
    %12 = vector.broadcast %cst_10 : f32 to vector<8x128xf32>
    %13 = arith.maximumf %11, %12 : vector<8x128xf32>
    %14 = arith.truncf %13 : vector<8x128xf32> to vector<8x128xbf16>
    %c0_11 = arith.constant 0 : index
    %c0_12 = arith.constant 0 : index
    %15 = vector.load %arg6[%c0_11, %c0_12] : memref<128x128xbf16, #tpu.memory_space<vmem>>, vector<128x128xbf16>
    %cst_13 = arith.constant dense<0.000000e+00> : vector<8x128xf32>
    %16 = tpu.matmul %14, %15, %cst_13 {dimension_numbers = #tpu.dot_dimension_numbers<[1], [0], [0], [1], [0, 0, 1, 1], [], []>} : vector<8x128xbf16>, vector<128x128xbf16>, vector<8x128xf32> -> vector<8x128xf32>
    %c0_14 = arith.constant 0 : index
    %c0_15 = arith.constant 0 : index
    %17 = vector.load %arg7[%c0_14, %c0_15] : memref<1x128xf32, #tpu.memory_space<vmem>>, vector<1x128xf32>
    %18 = vector.broadcast %17 : vector<1x128xf32> to vector<8x128xf32>
    %19 = arith.addf %16, %18 : vector<8x128xf32>
    %cst_16 = arith.constant 0.000000e+00 : f32
    %20 = vector.broadcast %cst_16 : f32 to vector<8x128xf32>
    %21 = arith.maximumf %19, %20 : vector<8x128xf32>
    %c0_17 = arith.constant 0 : index
    %c0_18 = arith.constant 0 : index
    %22 = vector.load %arg8[%c0_17, %c0_18] : memref<1x128xf32, #tpu.memory_space<vmem>>, vector<1x128xf32>
    %23 = vector.broadcast %22 : vector<1x128xf32> to vector<8x128xf32>
    %24 = arith.mulf %21, %23 : vector<8x128xf32>
    %cst_19 = arith.constant dense<0.000000e+00> : vector<8xf32>
    %25 = vector.multi_reduction <add>, %24, %cst_19 [1] : vector<8x128xf32> to vector<8xf32>
    %26 = vector.shape_cast %25 : vector<8xf32> to vector<8x1xf32>
    %c0_20 = arith.constant 0 : index
    %c0_21 = arith.constant 0 : index
    %27 = vector.load %arg9[%c0_20, %c0_21] : memref<1x1xf32, #tpu.memory_space<vmem>>, vector<1x1xf32>
    %28 = vector.broadcast %27 : vector<1x1xf32> to vector<8x1xf32>
    %29 = arith.addf %26, %28 : vector<8x1xf32>
    %30 = tpu.transpose %29, [1, 0] : vector<8x1xf32> -> vector<1x8xf32>
    %31 = vector.shape_cast %30 : vector<1x8xf32> to vector<1x1x8xf32>
    %c0_22 = arith.constant 0 : index
    %c0_23 = arith.constant 0 : index
    %c0_24 = arith.constant 0 : index
    %32 = vector.load %arg10[%c0_22, %c0_23, %c0_24] : memref<1x1x8xf32, #tpu.memory_space<vmem>>, vector<1x1x8xf32>
    tpu.vector_store %arg10[%c0_22, %c0_23, %c0_24], %31 {strides = array<i32>} : memref<1x1x8xf32, #tpu.memory_space<vmem>>, vector<1x1x8xf32>,
    return
  }
  func.func @transform_0(%arg0: i32) -> (i32, i32) {
    %c0_i32 = arith.constant 0 : i32
    %c0_i32_0 = arith.constant 0 : i32
    return %arg0, %c0_i32 : i32, i32
  }
  func.func @transform_1(%arg0: i32) -> (i32, i32) {
    %c0_i32 = arith.constant 0 : i32
    %c0_i32_0 = arith.constant 0 : i32
    return %arg0, %c0_i32 : i32, i32
  }
  func.func @transform_2(%arg0: i32) -> (i32, i32) {
    %c0_i32 = arith.constant 0 : i32
    %c0_i32_0 = arith.constant 0 : i32
    %c0_i32_1 = arith.constant 0 : i32
    return %c0_i32, %c0_i32_0 : i32, i32
  }
  func.func @transform_3(%arg0: i32) -> (i32, i32) {
    %c0_i32 = arith.constant 0 : i32
    %c0_i32_0 = arith.constant 0 : i32
    %c0_i32_1 = arith.constant 0 : i32
    return %c0_i32, %c0_i32_0 : i32, i32
  }
  func.func @transform_4(%arg0: i32) -> (i32, i32) {
    %c0_i32 = arith.constant 0 : i32
    %c0_i32_0 = arith.constant 0 : i32
    %c0_i32_1 = arith.constant 0 : i32
    return %c0_i32, %c0_i32_0 : i32, i32
  }
  func.func @transform_5(%arg0: i32) -> (i32, i32) {
    %c0_i32 = arith.constant 0 : i32
    %c0_i32_0 = arith.constant 0 : i32
    %c0_i32_1 = arith.constant 0 : i32
    return %c0_i32, %c0_i32_0 : i32, i32
  }
  func.func @transform_6(%arg0: i32) -> (i32, i32) {
    %c0_i32 = arith.constant 0 : i32
    %c0_i32_0 = arith.constant 0 : i32
    %c0_i32_1 = arith.constant 0 : i32
    return %c0_i32, %c0_i32_0 : i32, i32
  }
  func.func @transform_7(%arg0: i32) -> (i32, i32) {
    %c0_i32 = arith.constant 0 : i32
    %c0_i32_0 = arith.constant 0 : i32
    %c0_i32_1 = arith.constant 0 : i32
    return %c0_i32, %c0_i32_0 : i32, i32
  }
  func.func @transform_8(%arg0: i32) -> (i32, i32) {
    %c0_i32 = arith.constant 0 : i32
    %c0_i32_0 = arith.constant 0 : i32
    %c0_i32_1 = arith.constant 0 : i32
    return %c0_i32, %c0_i32_0 : i32, i32
  }
  func.func @transform_9(%arg0: i32) -> (i32, i32, i32) {
    %c0_i32 = arith.constant 0 : i32
    %c0_i32_0 = arith.constant 0 : i32
    %c0_i32_1 = arith.constant 0 : i32
    return %arg0, %c0_i32, %c0_i32_0 : i32, i32, i32
  }
}

</mosaic_0001>

<llo_original>
// kernel: tpu_custom_call.1
$region0: #{tpu_custom_call.1}
  #allocation0 [shape = 'u32[]', space=smem, size = 0x4, offset = 0x4, fixed_abs, tag = 'smem constant byte address 0x4 - core index']
  #allocation1 [shape = 'u32[72,128]{1,0:T(1,128)}', space=vmem, size = 0x9000, scoped, tag = 'internal scratch']
  #allocation2 [shape = 'f32[1,1]{1,0:T(1,128)S(1)}', space=vmem, size = 0x200, scoped, tag = 'scoped memory for tpu_custom_call.1']
  %s0 = inlined_call_operand.hbm [shape: f32[8,23], index: 0, kind: input, shape index: {}]
  %s1 = inlined_call_operand.hbm [shape: f32[8,5], index: 1, kind: input, shape index: {}]
  %s2 = inlined_call_operand.hbm [shape: bf16[23,128], index: 2, kind: input, shape index: {}]
  %s3 = inlined_call_operand.vmem [shape: bf16[5,128], index: 3, kind: input, shape index: {}]
  %s4 = inlined_call_operand.vmem [shape: f32[1,128], index: 4, kind: input, shape index: {}]
  %s5 = inlined_call_operand.hbm [shape: bf16[128,128], index: 5, kind: input, shape index: {}]
  %s6 = inlined_call_operand.vmem [shape: f32[1,128], index: 6, kind: input, shape index: {}]
  %s7 = inlined_call_operand.vmem [shape: f32[1,128], index: 7, kind: input, shape index: {}]
  %s8 = inlined_call_operand.<no memory space> [shape: f32[1,1], index: 8, kind: input, shape index: {}]
  %s9 = inlined_call_operand.hbm [shape: f32[1,1,8], index: 9, kind: output, shape index: {}]
  %s10 = sld [smem:[#allocation0]]
  $region62: #{tpu_custom_call.1} parent=0
    _
  %s12 = ssub.s32 1, %s10
  %s13 = scalar_select 0, %s12, %s10
  %v14 = vstv %s8
  %15 = vst [vmem:[#allocation2] sm:$0x1] %v14
  $region1: #{tpu_custom_call.1} parent=0
    #allocation3 [shape = 'u8[4096]{0}', space=vmem, size = 0x1000, scoped, tag = 'input window, operand 0, single buffered']
    #allocation4 [shape = 's32[1]{0}', space=sflag, size = 0x4, scoped, tag = 'scoped memory for tpu_custom_call.1']
    #allocation5 [shape = 's32[1]{0}', space=sflag, size = 0x4, scoped, tag = 'scoped memory for tpu_custom_call.1']
    #allocation6 [shape = 'u8[4096]{0}', space=vmem, size = 0x1000, scoped, tag = 'input window, operand 1, single buffered']
    #allocation7 [shape = 's32[1]{0}', space=sflag, size = 0x4, scoped, tag = 'scoped memory for tpu_custom_call.1']
    #allocation8 [shape = 'u8[6144]{0}', space=vmem, size = 0x1800, scoped, tag = 'input window, operand 2, single buffered']
    #allocation9 [shape = 'u8[32768]{0}', space=vmem, size = 0x8000, scoped, tag = 'input window, operand 5, single buffered']
    #allocation10 [shape = 's32[1]{0}', space=sflag, size = 0x4, scoped, tag = 'scoped memory for tpu_custom_call.1']
    #allocation11 [shape = 'u8[512]{0}', space=vmem, size = 0x400, scoped, tag = 'output window, operand 0, single buffered']
    %16 = vsyncpa [#allocation4], 0
    %17 = vsyncpa [#allocation7], 0
    %18 = vsyncpa [#allocation10], 0
    %19 = vsyncpa [#allocation5], 0
    // Predicated region
    $region2: #{tpu_custom_call.1} parent=1 // pred_check
      _
    $region3: #{tpu_custom_call.1} parent=1 // pred_check_branch
      %21 = sbr.rel (0) target = $region5
    $region4: #{tpu_custom_call.1} parent=1 // pred_region
      %23 = vsyncadd [#allocation4], 0
      %s25 = sshll.u32 %s0, 4
      %s26 = int_to_ptr.hbm [resolvable:$true] %s25
      %s27 = sshll.u32 [#allocation3], 4
      %s28 = int_to_ptr.vmem [resolvable:$true] %s27
      %30 = dma.hbm_to_vmem [thread:$0]  %s26, 128, %s28, [#allocation4]
    $region5: #{tpu_custom_call.1} parent=1 // pred_fallthru
      _
    // Predicated region
    $region6: #{tpu_custom_call.1} parent=1 // pred_check
      _
    $region7: #{tpu_custom_call.1} parent=1 // pred_check_branch
      %32 = sbr.rel (0) target = $region9
    $region8: #{tpu_custom_call.1} parent=1 // pred_region
      %34 = vsyncadd [#allocation7], 0
      %s36 = sshll.u32 %s1, 4
      %s37 = int_to_ptr.hbm [resolvable:$true] %s36
      %s38 = sshll.u32 [#allocation6], 4
      %s39 = int_to_ptr.vmem [resolvable:$true] %s38
      %41 = dma.hbm_to_vmem [thread:$0]  %s37, 128, %s39, [#allocation7]
    $region9: #{tpu_custom_call.1} parent=1 // pred_fallthru
      _
    // Predicated region
    $region10: #{tpu_custom_call.1} parent=1 // pred_check
      _
    $region11: #{tpu_custom_call.1} parent=1 // pred_check_branch
      %43 = sbr.rel (0) target = $region13
    $region12: #{tpu_custom_call.1} parent=1 // pred_region
      %45 = vsyncadd [#allocation7], 0
      %s46 = sshll.u32 %s2, 4
      %s47 = int_to_ptr.hbm [resolvable:$true] %s46
      %s48 = sshll.u32 [#allocation8], 4
      %s49 = int_to_ptr.vmem [resolvable:$true] %s48
      %54 = dma.hbm_to_vmem [thread:$0]  %s47, 192, %s49, [#allocation7], 64, 64, 4
    $region13: #{tpu_custom_call.1} parent=1 // pred_fallthru
      _
    // Predicated region
    $region14: #{tpu_custom_call.1} parent=1 // pred_check
      _
    $region15: #{tpu_custom_call.1} parent=1 // pred_check_branch
      %56 = sbr.rel (0) target = $region17
    $region16: #{tpu_custom_call.1} parent=1 // pred_region
      _
    $region17: #{tpu_custom_call.1} parent=1 // pred_fallthru
      _
    // Predicated region
    $region18: #{tpu_custom_call.1} parent=1 // pred_check
      _
    $region19: #{tpu_custom_call.1} parent=1 // pred_check_branch
      %58 = sbr.rel (0) target = $region21
    $region20: #{tpu_custom_call.1} parent=1 // pred_region
      _
    $region21: #{tpu_custom_call.1} parent=1 // pred_fallthru
      _
    // Predicated region
    $region22: #{tpu_custom_call.1} parent=1 // pred_check
      _
    $region23: #{tpu_custom_call.1} parent=1 // pred_check_branch
      %60 = sbr.rel (0) target = $region25
    $region24: #{tpu_custom_call.1} parent=1 // pred_region
      %62 = vsyncadd [#allocation10], 0
      %s63 = sshll.u32 %s5, 4
      %s64 = int_to_ptr.hbm [resolvable:$true] %s63
      %s65 = sshll.u32 [#allocation9], 4
      %s66 = int_to_ptr.vmem [resolvable:$true] %s65
      %71 = dma.hbm_to_vmem [thread:$0]  %s64, 1024, %s66, [#allocation10], 64, 64, 4
    $region25: #{tpu_custom_call.1} parent=1 // pred_fallthru
      _
    // Predicated region
    $region26: #{tpu_custom_call.1} parent=1 // pred_check
      _
    $region27: #{tpu_custom_call.1} parent=1 // pred_check_branch
      %73 = sbr.rel (0) target = $region29
    $region28: #{tpu_custom_call.1} parent=1 // pred_region
      _
    $region29: #{tpu_custom_call.1} parent=1 // pred_fallthru
      _
    // Predicated region
    $region30: #{tpu_custom_call.1} parent=1 // pred_check
      _
    $region31: #{tpu_custom_call.1} parent=1 // pred_check_branch
      %75 = sbr.rel (0) target = $region33
    $region32: #{tpu_custom_call.1} parent=1 // pred_region
      _
    $region33: #{tpu_custom_call.1} parent=1 // pred_fallthru
      _
    // Predicated region
    $region34: #{tpu_custom_call.1} parent=1 // pred_check
      _
    $region35: #{tpu_custom_call.1} parent=1 // pred_check_branch
      %77 = sbr.rel (0) target = $region37
    $region36: #{tpu_custom_call.1} parent=1 // pred_region
      _
    $region37: #{tpu_custom_call.1} parent=1 // pred_fallthru
      _
    // Predicated region
    $region38: #{tpu_custom_call.1} parent=1 // pred_check
      _
    $region39: #{tpu_custom_call.1} parent=1 // pred_check_branch
      %79 = sbr.rel (0) target = $region41
    $region40: #{tpu_custom_call.1} parent=1 // pred_region
      %81 = dma.done [#allocation4], 128
    $region41: #{tpu_custom_call.1} parent=1 // pred_fallthru
      _
    // Predicated region
    $region42: #{tpu_custom_call.1} parent=1 // pred_check
      _
    $region43: #{tpu_custom_call.1} parent=1 // pred_check_branch
      %83 = sbr.rel (0) target = $region45
    $region44: #{tpu_custom_call.1} parent=1 // pred_region
      %85 = dma.done [#allocation7], 128
    $region45: #{tpu_custom_call.1} parent=1 // pred_fallthru
      _
    // Predicated region
    $region46: #{tpu_custom_call.1} parent=1 // pred_check
      _
    $region47: #{tpu_custom_call.1} parent=1 // pred_check_branch
      %87 = sbr.rel (0) target = $region49
    $region48: #{tpu_custom_call.1} parent=1 // pred_region
      %89 = dma.done [#allocation7], 192
    $region49: #{tpu_custom_call.1} parent=1 // pred_fallthru
      _
    // Predicated region
    $region50: #{tpu_custom_call.1} parent=1 // pred_check
      _
    $region51: #{tpu_custom_call.1} parent=1 // pred_check_branch
      %91 = sbr.rel (0) target = $region53
    $region52: #{tpu_custom_call.1} parent=1 // pred_region
      %93 = dma.done [#allocation10], 1024
    $region53: #{tpu_custom_call.1} parent=1 // pred_fallthru
      _
    %v95 = vld [vmem:[#allocation3] sm:$0xff]
    %v96 = vld [vmem:[#allocation6] sm:$0xff]
    %v97 = vpack.c.bf16 %v95, %v95
    %v98 = vld [vmem:[#allocation8] sm:$0xf]
    %v99 = vld [vmem:[#allocation8 + $0x4] sm:$0xf]
    %v100 = vld [vmem:[#allocation8 + $0x8] sm:$0xf]
    %v101 = vpack.c.bf16 %v96, %v96
    %v102 = vld [vmem:[%s3] sm:$0x7]
    %vm103 = vcmask 39936
    %v105 = vsel %vm103, %v101, 0
    %vm107 = vcmask 1041408
    %vm108 = vcmask 1042432
    %v109 = vsel %vm107, 4294967295, 65535
    %v110 = vsel %vm108, %v109, 0
    %v112 = vand.u32 %v102, %v110
    %114 = vmatpush.bf16.msra.mxu0 0
    %115 = vmatpush.bf16.msra.mxu0 0
    %116 = vmatpush.bf16.msra.mxu0 0
    %117 = vmatpush.bf16.msra.mxu0 0
    %118 = vmatpush.bf16.msra.mxu0 0
    %119 = vmatpush.bf16.msra.mxu0 0
    %120 = vmatpush.bf16.msra.mxu0 0
    %121 = vmatpush.bf16.msra.mxu0 %v112
    %122 = vmatmul.bf16.gmra.mxu0 %v105
    %v123 = vpop.f32.mrf.mxu0
    %v124 = vadd.f32 0.0, %v123
    %v125 = vpop.f32.mrf.mxu0
    %126 = vdwg.mxu0
    %v130 = vunpack.c.l.b16 %v98
    %v131 = vunpack.c.l.b16 %v99
    %v132 = vunpack.c.l.b16 %v100
    %v133 = vpack.c.b16 %v131, %v130
    %v134 = vpack.c.b16 %v132, %v132
    %vm136 = vcmask 187392
    %v138 = vsel %vm136, %v97, 0
    %vm140 = vcmask 1043456
    %v141 = vsel %vm108, 4294967295, 65535
    %v142 = vsel %vm140, %v141, 0
    %v144 = vand.u32 %v134, %v142
    %146 = vmatpush.bf16.msra.mxu0 0
    %147 = vmatpush.bf16.msra.mxu0 0
    %148 = vmatpush.bf16.msra.mxu0 0
    %149 = vmatpush.bf16.msra.mxu0 0
    %150 = vmatpush.bf16.msra.mxu0 0
    %151 = vmatpush.bf16.msra.mxu0 0
    %152 = vmatpush.bf16.msra.mxu0 %v144
    %153 = vmatpush.bf16.msra.mxu0 %v133
    %154 = vmatmul.bf16.gmra.mxu0 %v138
    %v155 = vpop.f32.mrf.mxu0
    %v156 = vadd.f32 %v124, %v155
    %v157 = vpop.f32.mrf.mxu0
    %158 = vdwg.mxu0
    %v159 = vld [vmem:[%s4] sm:$0x1]
    %v161 = vperm.slane %v159, 0
    %v163 = vadd.f32 %v156, %v161
    %v164 = vmax.f32 %v163, 0.0
    %v165 = vpack.c.bf16 %v164, %v164
    %v166 = vld [vmem:[#allocation9] sm:$0xf]
    %v167 = vld [vmem:[#allocation9 + $0x4] sm:$0xf]
    %v168 = vld [vmem:[#allocation9 + $0x8] sm:$0xf]
    %v169 = vld [vmem:[#allocation9 + $0xc] sm:$0xf]
    %v170 = vld [vmem:[#allocation9 + $0x10] sm:$0xf]
    %v171 = vld [vmem:[#allocation9 + $0x14] sm:$0xf]
    %v172 = vld [vmem:[#allocation9 + $0x18] sm:$0xf]
    %v173 = vld [vmem:[#allocation9 + $0x1c] sm:$0xf]
    %v174 = vld [vmem:[#allocation9 + $0x20] sm:$0xf]
    %v175 = vld [vmem:[#allocation9 + $0x24] sm:$0xf]
    %v176 = vld [vmem:[#allocation9 + $0x28] sm:$0xf]
    %v177 = vld [vmem:[#allocation9 + $0x2c] sm:$0xf]
    %v178 = vld [vmem:[#allocation9 + $0x30] sm:$0xf]
    %v179 = vld [vmem:[#allocation9 + $0x34] sm:$0xf]
    %v180 = vld [vmem:[#allocation9 + $0x38] sm:$0xf]
    %v181 = vld [vmem:[#allocation9 + $0x3c] sm:$0xf]
    %v182 = vld [vmem:[%s6] sm:$0x1]
    %v184 = vperm.slane %v182, 0
    %v202 = vunpack.c.l.b16 %v166
    %v203 = vunpack.c.l.b16 %v167
    %v204 = vunpack.c.l.b16 %v168
    %v205 = vunpack.c.l.b16 %v169
    %v206 = vunpack.c.l.b16 %v170
    %v207 = vunpack.c.l.b16 %v171
    %v208 = vunpack.c.l.b16 %v172
    %v209 = vunpack.c.l.b16 %v173
    %v210 = vunpack.c.l.b16 %v174
    %v211 = vunpack.c.l.b16 %v175
    %v212 = vunpack.c.l.b16 %v176
    %v213 = vunpack.c.l.b16 %v177
    %v214 = vunpack.c.l.b16 %v178
    %v215 = vunpack.c.l.b16 %v179
    %v216 = vunpack.c.l.b16 %v180
    %v217 = vunpack.c.l.b16 %v181
    %v218 = vpack.c.b16 %v203, %v202
    %v219 = vpack.c.b16 %v205, %v204
    %v220 = vpack.c.b16 %v207, %v206
    %v221 = vpack.c.b16 %v209, %v208
    %v222 = vpack.c.b16 %v211, %v210
    %v223 = vpack.c.b16 %v213, %v212
    %v224 = vpack.c.b16 %v215, %v214
    %v225 = vpack.c.b16 %v217, %v216
    %234 = vmatpush.bf16.msra.mxu0 %v225
    %235 = vmatpush.bf16.msra.mxu0 %v224
    %236 = vmatpush.bf16.msra.mxu0 %v223
    %237 = vmatpush.bf16.msra.mxu0 %v222
    %238 = vmatpush.bf16.msra.mxu0 %v221
    %239 = vmatpush.bf16.msra.mxu0 %v220
    %240 = vmatpush.bf16.msra.mxu0 %v219
    %241 = vmatpush.bf16.msra.mxu0 %v218
    %242 = vmatmul.bf16.gmra.mxu0 %v165
    %v243 = vpop.f32.mrf.mxu0
    %v244 = vadd.f32 %v184, %v243
    %v245 = vpop.f32.mrf.mxu0
    %246 = vdwg.mxu0
    %v247 = vmax.f32 %v244, 0.0
    %v248 = vld [vmem:[%s7] sm:$0x1]
    %v250 = vperm.slane %v248, 0
    %v252 = vmul.f32 %v247, %v250
    %253 = vadd.xlane.f32.xlu0 %v252
    %v254 = vpop.xlane.xlu0 %253
    %v255 = vld [vmem:[#allocation2] sm:$0x1]
    %v257 = vperm.slane %v255, 0
    %v259 = vadd.f32 %v254, %v257
    %260 = vxpose.xlu0.b32.start [1/16] %v259, 128
    %261 = vxpose.xlu0.b32.cont [2/16] 0.0, 128
    %262 = vxpose.xlu0.b32.cont [3/16] 0.0, 128
    %263 = vxpose.xlu0.b32.cont [4/16] 0.0, 128
    %264 = vxpose.xlu0.b32.cont [5/16] 0.0, 128
    %265 = vxpose.xlu0.b32.cont [6/16] 0.0, 128
    %266 = vxpose.xlu0.b32.cont [7/16] 0.0, 128
    %267 = vxpose.xlu0.b32.cont [8/16] 0.0, 128
    %268 = vxpose.xlu0.b32.cont [9/16] 0.0, 128
    %269 = vxpose.xlu0.b32.cont [10/16] 0.0, 128
    %270 = vxpose.xlu0.b32.cont [11/16] 0.0, 128
    %271 = vxpose.xlu0.b32.cont [12/16] 0.0, 128
    %272 = vxpose.xlu0.b32.cont [13/16] 0.0, 128
    %273 = vxpose.xlu0.b32.cont [14/16] 0.0, 128
    %274 = vxpose.xlu0.b32.cont [15/16] 0.0, 128
    %275 = vxpose.xlu0.b32.end [16/16] 0.0, 128
    %v276 = vpop.trf.xlu0
    %v277 = vpop.trf.xlu0
    %v278 = vpop.trf.xlu0
    %v279 = vpop.trf.xlu0
    %v280 = vpop.trf.xlu0
    %v281 = vpop.trf.xlu0
    %v282 = vpop.trf.xlu0
    %v283 = vpop.trf.xlu0
    %v284 = vpop.trf.xlu0
    %v285 = vpop.trf.xlu0
    %v286 = vpop.trf.xlu0
    %v287 = vpop.trf.xlu0
    %v288 = vpop.trf.xlu0
    %v289 = vpop.trf.xlu0
    %v290 = vpop.trf.xlu0
    %v291 = vpop.trf.xlu0
    %vm292 = vcmask 57344
    %293 = vst.msk [vmem:[#allocation11] sm:$0x1] %vm292, %v276
    // Predicated region
    $region54: #{tpu_custom_call.1} parent=1 // pred_check
      _
    $region55: #{tpu_custom_call.1} parent=1 // pred_check_branch
      %295 = sbr.rel (0) target = $region57
    $region56: #{tpu_custom_call.1} parent=1 // pred_region
      %297 = vsyncadd [#allocation5], 0
      %s299 = sshll.u32 [#allocation11], 4
      %s300 = int_to_ptr.vmem [resolvable:$true] %s299
      %s301 = sshll.u32 %s9, 4
      %s302 = int_to_ptr.hbm [resolvable:$true] %s301
      %304 = dma.vmem_to_hbm [thread:$0]  %s300, 16, %s302, [#allocation5]
    $region57: #{tpu_custom_call.1} parent=1 // pred_fallthru
      _
    // Predicated region
    $region58: #{tpu_custom_call.1} parent=1 // pred_check
      _
    $region59: #{tpu_custom_call.1} parent=1 // pred_check_branch
      %306 = sbr.rel (0) target = $region61
    $region60: #{tpu_custom_call.1} parent=1 // pred_region
      %308 = dma.done [#allocation5], 16
    $region61: #{tpu_custom_call.1} parent=1 // pred_fallthru
      _
    %309 = vsyncpa [#allocation4], 1
    %310 = vsyncpa [#allocation7], 1
    %311 = vsyncpa [#allocation10], 1
    %312 = vsyncpa [#allocation5], 1

</llo_original>
